<compile_context>
chip_gen: v5e
topology: v5e:2x2
jax: 0.10.0
libtpu: 0.0.40
codegen_flags: <defaults>
</compile_context>

<pallas_src>
import jax
import jax.numpy as jnp
from jax.experimental import pallas as pl
from jax.experimental.pallas import tpu as pltpu


def decoder_kernel(x_ref, w1_ref, b1_ref, w2_ref, b2_ref, o_ref):
    # fc1 + relu  (MXU matmul, f32 accumulate; bias/relu on VPU)
    h = jnp.dot(x_ref[...], w1_ref[...], preferred_element_type=jnp.float32)
    h = jnp.maximum(h + b1_ref[...], 0.0)
    # fc2 + sigmoid (exp goes to the EUP slot; effectively free here).
    # Keep h in f32; let the dot handle mixed precision if weights are bf16.
    y = jnp.dot(h, w2_ref[...], preferred_element_type=jnp.float32)
    y = y + b2_ref[...]
    o_ref[...] = jax.nn.sigmoid(y).astype(o_ref.dtype)


def _round_up(n, m):
    return ((n + m - 1) // m) * m


def decoder_forward(x, w1, b1, w2, b2, *, block_b=2048):
    """x: (B, input_size); w1: (input_size, hidden); b1: (1, hidden);
       w2: (hidden, output_size); b2: (1, output_size) -> (B, output_size)."""
    B, in_size = x.shape
    hid = w1.shape[1]
    out_size = w2.shape[1]
    dtype = x.dtype

    # --- Batch tiling only.  tb is forced to a multiple of 8 so the
    # (tb, in_size) / (tb, out_size) blocks satisfy the sublane constraint.
    tb = _round_up(min(block_b, B), 8)
    B_p = _round_up(B, tb)
    if B_p != B:
        xp = jnp.zeros((B_p, in_size), dtype).at[:B, :].set(x)
    else:
        xp = x

    grid = (B_p // tb,)

    out_padded = pl.pallas_call(
        decoder_kernel,
        out_shape=jax.ShapeDtypeStruct((B_p, out_size), dtype),
        grid=grid,
        in_specs=[
            # Activations: tiled along batch, natural (full-extent) lane width.
            pl.BlockSpec((tb, in_size), lambda i: (i, 0)),
            # Weights / biases: full-extent blocks, constant index_map ->
            # VMEM-resident across grid steps; Mosaic pads in-vreg as needed.
            pl.BlockSpec((in_size, hid), lambda i: (0, 0)),
            pl.BlockSpec((1, hid), lambda i: (0, 0)),
            pl.BlockSpec((hid, out_size), lambda i: (0, 0)),
            pl.BlockSpec((1, out_size), lambda i: (0, 0)),
        ],
        out_specs=pl.BlockSpec((tb, out_size), lambda i: (i, 0)),
        compiler_params=pltpu.CompilerParams(
            dimension_semantics=("parallel",),
        ),
    )(xp, w1, b1, w2, b2)

    # Slice away batch padding only (no lane padding to remove).
    return out_padded[:B] if B_p != B else out_padded


def reference_forward(x, w1, b1, w2, b2):
    h = jnp.maximum(x @ w1 + b1, 0.0)
    return jax.nn.sigmoid(h @ w2 + b2)


if __name__ == "__main__":
    # Shapes implied by the module: Linear layers over a flat feature vector.
    batch = 8
    input_size = 32
    output_size = 64
    hidden_size = (input_size + output_size) // 2  # 48

    key = jax.random.PRNGKey(0)
    kx, k1, k2, k3, k4, kx2, kx3 = jax.random.split(key, 7)

    x = jax.random.normal(kx, (batch, input_size), dtype=jnp.float32)

    # Deterministic parameter init (PyTorch-style uniform(-1/sqrt(fan_in), 1/sqrt(fan_in))),
    # stored as (in, out) so the kernel does x @ W.
    lim1 = 1.0 / (input_size ** 0.5)
    w1 = jax.random.uniform(k1, (input_size, hidden_size), jnp.float32, -lim1, lim1)
    b1 = jax.random.uniform(k2, (1, hidden_size), jnp.float32, -lim1, lim1)
    lim2 = 1.0 / (hidden_size ** 0.5)
    w2 = jax.random.uniform(k3, (hidden_size, output_size), jnp.float32, -lim2, lim2)
    b2 = jax.random.uniform(k4, (1, output_size), jnp.float32, -lim2, lim2)

    # Small-batch case (single grid step, full-extent blocks everywhere).
    out = decoder_forward(x, w1, b1, w2, b2)
    out = jax.block_until_ready(out)
    ref = reference_forward(x, w1, b1, w2, b2)
    assert out.shape == (batch, output_size)
    assert jnp.allclose(out, ref, atol=1e-5, rtol=1e-5), "mismatch vs reference (small batch)"

    # Multi-step batch grid with VMEM-resident weights (2 grid steps).
    big_batch = 4096
    xb = jax.random.normal(kx2, (big_batch, input_size), dtype=jnp.float32)
    out_b = decoder_forward(xb, w1, b1, w2, b2, block_b=2048)
    out_b = jax.block_until_ready(out_b)
    ref_b = reference_forward(xb, w1, b1, w2, b2)
    assert out_b.shape == (big_batch, output_size)
    assert jnp.allclose(out_b, ref_b, atol=1e-5, rtol=1e-5), "mismatch vs reference (big batch)"

    # Non-aligned batch exercising batch padding + the [:B] slice.
    odd_batch = 1000
    xo = jax.random.normal(kx3, (odd_batch, input_size), dtype=jnp.float32)
    out_o = decoder_forward(xo, w1, b1, w2, b2, block_b=256)
    out_o = jax.block_until_ready(out_o)
    ref_o = reference_forward(xo, w1, b1, w2, b2)
    assert out_o.shape == (odd_batch, output_size)
    assert jnp.allclose(out_o, ref_o, atol=1e-5, rtol=1e-5), "mismatch vs reference (odd batch)"

    print("KERNEL_OK")
</pallas_src>

<mosaic_0001>
module attributes {stable_mosaic.version = 11 : i64} {
  func.func @decoder_kernel(%arg0: i32, %arg1: memref<8x32xf32, #tpu.memory_space<vmem>>, %arg2: memref<32x48xf32, #tpu.memory_space<vmem>>, %arg3: memref<1x48xf32, #tpu.memory_space<vmem>>, %arg4: memref<48x64xf32, #tpu.memory_space<vmem>>, %arg5: memref<1x64xf32, #tpu.memory_space<vmem>>, %arg6: memref<8x64xf32, #tpu.memory_space<vmem>>) attributes {dimension_semantics = [#tpu.dimension_semantics<parallel>], iteration_bounds = array<i64: 1>, scalar_prefetch = 0 : i64, scratch_operands = 0 : i64, tpu.core_type = #tpu.core_type<tc>, window_params = [{transform_indices = @transform_0, window_bounds = array<i64: 8, 32>}, {pipeline_mode = #tpu.pipeline_mode<synchronous>, transform_indices = @transform_1, window_bounds = array<i64: 32, 48>}, {pipeline_mode = #tpu.pipeline_mode<synchronous>, transform_indices = @transform_2, window_bounds = array<i64: 1, 48>}, {pipeline_mode = #tpu.pipeline_mode<synchronous>, transform_indices = @transform_3, window_bounds = array<i64: 48, 64>}, {pipeline_mode = #tpu.pipeline_mode<synchronous>, transform_indices = @transform_4, window_bounds = array<i64: 1, 64>}, {transform_indices = @transform_5, window_bounds = array<i64: 8, 64>}]} {
    %c0 = arith.constant 0 : index
    %c0_0 = arith.constant 0 : index
    %0 = vector.load %arg1[%c0, %c0_0] : memref<8x32xf32, #tpu.memory_space<vmem>>, vector<8x32xf32>
    %c0_1 = arith.constant 0 : index
    %c0_2 = arith.constant 0 : index
    %1 = vector.load %arg2[%c0_1, %c0_2] : memref<32x48xf32, #tpu.memory_space<vmem>>, vector<32x48xf32>
    %cst = arith.constant dense<0.000000e+00> : vector<8x48xf32>
    %2 = tpu.matmul %0, %1, %cst {dimension_numbers = #tpu.dot_dimension_numbers<[1], [0], [0], [1], [0, 0, 1, 1], [], []>} : vector<8x32xf32>, vector<32x48xf32>, vector<8x48xf32> -> vector<8x48xf32>
    %c0_3 = arith.constant 0 : index
    %c0_4 = arith.constant 0 : index
    %3 = vector.load %arg3[%c0_3, %c0_4] : memref<1x48xf32, #tpu.memory_space<vmem>>, vector<1x48xf32>
    %4 = vector.broadcast %3 : vector<1x48xf32> to vector<8x48xf32>
    %5 = arith.addf %2, %4 : vector<8x48xf32>
    %cst_5 = arith.constant 0.000000e+00 : f32
    %6 = vector.broadcast %cst_5 : f32 to vector<8x48xf32>
    %7 = arith.maximumf %5, %6 : vector<8x48xf32>
    %c0_6 = arith.constant 0 : index
    %c0_7 = arith.constant 0 : index
    %8 = vector.load %arg4[%c0_6, %c0_7] : memref<48x64xf32, #tpu.memory_space<vmem>>, vector<48x64xf32>
    %cst_8 = arith.constant dense<0.000000e+00> : vector<8x64xf32>
    %9 = tpu.matmul %7, %8, %cst_8 {dimension_numbers = #tpu.dot_dimension_numbers<[1], [0], [0], [1], [0, 0, 1, 1], [], []>} : vector<8x48xf32>, vector<48x64xf32>, vector<8x64xf32> -> vector<8x64xf32>
    %c0_9 = arith.constant 0 : index
    %c0_10 = arith.constant 0 : index
    %10 = vector.load %arg5[%c0_9, %c0_10] : memref<1x64xf32, #tpu.memory_space<vmem>>, vector<1x64xf32>
    %11 = vector.broadcast %10 : vector<1x64xf32> to vector<8x64xf32>
    %12 = arith.addf %9, %11 : vector<8x64xf32>
    %13 = arith.negf %12 : vector<8x64xf32>
    %14 = math.exp %13 : vector<8x64xf32>
    %cst_11 = arith.constant 1.000000e+00 : f32
    %15 = vector.broadcast %cst_11 : f32 to vector<8x64xf32>
    %16 = arith.addf %15, %14 : vector<8x64xf32>
    %17 = arith.divf %15, %16 : vector<8x64xf32>
    %c0_12 = arith.constant 0 : index
    %c0_13 = arith.constant 0 : index
    %18 = vector.load %arg6[%c0_12, %c0_13] : memref<8x64xf32, #tpu.memory_space<vmem>>, vector<8x64xf32>
    tpu.vector_store %arg6[%c0_12, %c0_13], %17 {strides = array<i32>} : memref<8x64xf32, #tpu.memory_space<vmem>>, vector<8x64xf32>,
    return
  }
  func.func @transform_0(%arg0: i32) -> (i32, i32) {
    %c0_i32 = arith.constant 0 : i32
    %c0_i32_0 = arith.constant 0 : i32
    return %arg0, %c0_i32 : i32, i32
  }
  func.func @transform_1(%arg0: i32) -> (i32, i32) {
    %c0_i32 = arith.constant 0 : i32
    %c0_i32_0 = arith.constant 0 : i32
    %c0_i32_1 = arith.constant 0 : i32
    return %c0_i32, %c0_i32_0 : i32, i32
  }
  func.func @transform_2(%arg0: i32) -> (i32, i32) {
    %c0_i32 = arith.constant 0 : i32
    %c0_i32_0 = arith.constant 0 : i32
    %c0_i32_1 = arith.constant 0 : i32
    return %c0_i32, %c0_i32_0 : i32, i32
  }
  func.func @transform_3(%arg0: i32) -> (i32, i32) {
    %c0_i32 = arith.constant 0 : i32
    %c0_i32_0 = arith.constant 0 : i32
    %c0_i32_1 = arith.constant 0 : i32
    return %c0_i32, %c0_i32_0 : i32, i32
  }
  func.func @transform_4(%arg0: i32) -> (i32, i32) {
    %c0_i32 = arith.constant 0 : i32
    %c0_i32_0 = arith.constant 0 : i32
    %c0_i32_1 = arith.constant 0 : i32
    return %c0_i32, %c0_i32_0 : i32, i32
  }
  func.func @transform_5(%arg0: i32) -> (i32, i32) {
    %c0_i32 = arith.constant 0 : i32
    %c0_i32_0 = arith.constant 0 : i32
    return %arg0, %c0_i32 : i32, i32
  }
}

</mosaic_0001>

<llo_original>
// kernel: tpu_custom_call.1
$region0: #{tpu_custom_call.1}
  #allocation0 [shape = 'u32[]', space=smem, size = 0x4, offset = 0x4, fixed_abs, tag = 'smem constant byte address 0x4 - core index']
  #allocation1 [shape = 'u32[72,128]{1,0:T(1,128)}', space=vmem, size = 0x9000, scoped, tag = 'internal scratch']
  %s0 = inlined_call_operand.hbm [shape: f32[8,32], index: 0, kind: input, shape index: {}]
  %s1 = inlined_call_operand.hbm [shape: f32[32,48], index: 1, kind: input, shape index: {}]
  %s2 = inlined_call_operand.vmem [shape: f32[1,48], index: 2, kind: input, shape index: {}]
  %s3 = inlined_call_operand.hbm [shape: f32[48,64], index: 3, kind: input, shape index: {}]
  %s4 = inlined_call_operand.vmem [shape: f32[1,64], index: 4, kind: input, shape index: {}]
  %s5 = inlined_call_operand.hbm [shape: f32[8,64], index: 5, kind: output, shape index: {}]
  %s6 = sld [smem:[#allocation0]]
  $region42: #{tpu_custom_call.1} parent=0
    _
  %s8 = ssub.s32 1, %s6
  %s9 = scalar_select 0, %s8, %s6
  $region1: #{tpu_custom_call.1} parent=0
    #allocation2 [shape = 'u8[4096]{0}', space=vmem, size = 0x1000, scoped, tag = 'input window, operand 0, single buffered']
    #allocation3 [shape = 's32[1]{0}', space=sflag, size = 0x4, scoped, tag = 'scoped memory for tpu_custom_call.1']
    #allocation4 [shape = 's32[1]{0}', space=sflag, size = 0x4, scoped, tag = 'scoped memory for tpu_custom_call.1']
    #allocation5 [shape = 'u8[16384]{0}', space=vmem, size = 0x4000, scoped, tag = 'input window, operand 1, single buffered']
    #allocation6 [shape = 's32[1]{0}', space=sflag, size = 0x4, scoped, tag = 'scoped memory for tpu_custom_call.1']
    #allocation7 [shape = 'u8[24576]{0}', space=vmem, size = 0x6000, scoped, tag = 'input window, operand 3, single buffered']
    #allocation8 [shape = 'u8[4096]{0}', space=vmem, size = 0x1000, scoped, tag = 'output window, operand 0, single buffered']
    %10 = vsyncpa [#allocation3], 0
    %11 = vsyncpa [#allocation6], 0
    %12 = vsyncpa [#allocation4], 0
    // Predicated region
    $region2: #{tpu_custom_call.1} parent=1 // pred_check
      _
    $region3: #{tpu_custom_call.1} parent=1 // pred_check_branch
      %14 = sbr.rel (0) target = $region5
    $region4: #{tpu_custom_call.1} parent=1 // pred_region
      %16 = vsyncadd [#allocation3], 0
      %s18 = sshll.u32 %s0, 4
      %s19 = int_to_ptr.hbm [resolvable:$true] %s18
      %s20 = sshll.u32 [#allocation2], 4
      %s21 = int_to_ptr.vmem [resolvable:$true] %s20
      %23 = dma.hbm_to_vmem [thread:$0]  %s19, 128, %s21, [#allocation3]
    $region5: #{tpu_custom_call.1} parent=1 // pred_fallthru
      _
    // Predicated region
    $region6: #{tpu_custom_call.1} parent=1 // pred_check
      _
    $region7: #{tpu_custom_call.1} parent=1 // pred_check_branch
      %25 = sbr.rel (0) target = $region9
    $region8: #{tpu_custom_call.1} parent=1 // pred_region
      %27 = vsyncadd [#allocation6], 0
      %s28 = sshll.u32 %s1, 4
      %s29 = int_to_ptr.hbm [resolvable:$true] %s28
      %s30 = sshll.u32 [#allocation5], 4
      %s31 = int_to_ptr.vmem [resolvable:$true] %s30
      %36 = dma.hbm_to_vmem [thread:$0]  %s29, 512, %s31, [#allocation6], 128, 128, 8
    $region9: #{tpu_custom_call.1} parent=1 // pred_fallthru
      _
    // Predicated region
    $region10: #{tpu_custom_call.1} parent=1 // pred_check
      _
    $region11: #{tpu_custom_call.1} parent=1 // pred_check_branch
      %38 = sbr.rel (0) target = $region13
    $region12: #{tpu_custom_call.1} parent=1 // pred_region
      _
    $region13: #{tpu_custom_call.1} parent=1 // pred_fallthru
      _
    // Predicated region
    $region14: #{tpu_custom_call.1} parent=1 // pred_check
      _
    $region15: #{tpu_custom_call.1} parent=1 // pred_check_branch
      %40 = sbr.rel (0) target = $region17
    $region16: #{tpu_custom_call.1} parent=1 // pred_region
      %42 = vsyncadd [#allocation6], 0
      %s43 = sshll.u32 %s3, 4
      %s44 = int_to_ptr.hbm [resolvable:$true] %s43
      %s45 = sshll.u32 [#allocation7], 4
      %s46 = int_to_ptr.vmem [resolvable:$true] %s45
      %51 = dma.hbm_to_vmem [thread:$0]  %s44, 768, %s46, [#allocation6], 128, 128, 8
    $region17: #{tpu_custom_call.1} parent=1 // pred_fallthru
      _
    // Predicated region
    $region18: #{tpu_custom_call.1} parent=1 // pred_check
      _
    $region19: #{tpu_custom_call.1} parent=1 // pred_check_branch
      %53 = sbr.rel (0) target = $region21
    $region20: #{tpu_custom_call.1} parent=1 // pred_region
      _
    $region21: #{tpu_custom_call.1} parent=1 // pred_fallthru
      _
    // Predicated region
    $region22: #{tpu_custom_call.1} parent=1 // pred_check
      _
    $region23: #{tpu_custom_call.1} parent=1 // pred_check_branch
      %55 = sbr.rel (0) target = $region25
    $region24: #{tpu_custom_call.1} parent=1 // pred_region
      %57 = dma.done [#allocation3], 128
    $region25: #{tpu_custom_call.1} parent=1 // pred_fallthru
      _
    // Predicated region
    $region26: #{tpu_custom_call.1} parent=1 // pred_check
      _
    $region27: #{tpu_custom_call.1} parent=1 // pred_check_branch
      %59 = sbr.rel (0) target = $region29
    $region28: #{tpu_custom_call.1} parent=1 // pred_region
      %61 = dma.done [#allocation6], 512
    $region29: #{tpu_custom_call.1} parent=1 // pred_fallthru
      _
    // Predicated region
    $region30: #{tpu_custom_call.1} parent=1 // pred_check
      _
    $region31: #{tpu_custom_call.1} parent=1 // pred_check_branch
      %63 = sbr.rel (0) target = $region33
    $region32: #{tpu_custom_call.1} parent=1 // pred_region
      %65 = dma.done [#allocation6], 768
    $region33: #{tpu_custom_call.1} parent=1 // pred_fallthru
      _
    %v66 = vld [vmem:[#allocation2] sm:$0xff]
    %v67 = vld [vmem:[#allocation5] sm:$0xff]
    %v68 = vld [vmem:[#allocation5 + $0x8] sm:$0xff]
    %v69 = vld [vmem:[#allocation5 + $0x10] sm:$0xff]
    %v70 = vld [vmem:[#allocation5 + $0x18] sm:$0xff]
    %v71 = vld [vmem:[%s2] sm:$0x1]
    %v73 = vperm.slane %v71, 0
    %vm75 = vcmask 261120
    %v77 = vsel %vm75, %v66, 0
    %79 = vmatpush.msra.mxu0 0.0
    %80 = vmatpush.msra.mxu0 0.0
    %81 = vmatpush.msra.mxu0 0.0
    %82 = vmatpush.msra.mxu0 0.0
    %83 = vmatpush.msra.mxu0 0.0
    %84 = vmatpush.msra.mxu0 0.0
    %85 = vmatpush.msra.mxu0 0.0
    %86 = vmatpush.msra.mxu0 0.0
    %87 = vmatpush.msra.mxu0 0.0
    %88 = vmatpush.msra.mxu0 0.0
    %89 = vmatpush.msra.mxu0 0.0
    %90 = vmatpush.msra.mxu0 0.0
    %91 = vmatpush.msra.mxu0 %v70
    %92 = vmatpush.msra.mxu0 %v69
    %93 = vmatpush.msra.mxu0 %v68
    %94 = vmatpush.msra.mxu0 %v67
    %95 = vmatmul.f32.gmra.mxu0 %v77
    %v96 = vpop.f32.mrf.mxu0
    %v97 = vadd.f32 %v73, %v96
    %98 = vdwg.mxu0
    %v99 = vmax.f32 %v97, 0.0
    %v100 = vld [vmem:[#allocation7] sm:$0xff]
    %v101 = vld [vmem:[#allocation7 + $0x8] sm:$0xff]
    %v102 = vld [vmem:[#allocation7 + $0x10] sm:$0xff]
    %v103 = vld [vmem:[#allocation7 + $0x18] sm:$0xff]
    %v104 = vld [vmem:[#allocation7 + $0x20] sm:$0xff]
    %v105 = vld [vmem:[#allocation7 + $0x28] sm:$0xff]
    %v106 = vld [vmem:[%s4] sm:$0x1]
    %v108 = vperm.slane %v106, 0
    %vm110 = vcmask 392192
    %v112 = vsel %vm110, %v99, 0
    %114 = vmatpush.msra.mxu0 0.0
    %115 = vmatpush.msra.mxu0 0.0
    %116 = vmatpush.msra.mxu0 0.0
    %117 = vmatpush.msra.mxu0 0.0
    %118 = vmatpush.msra.mxu0 0.0
    %119 = vmatpush.msra.mxu0 0.0
    %120 = vmatpush.msra.mxu0 0.0
    %121 = vmatpush.msra.mxu0 0.0
    %122 = vmatpush.msra.mxu0 0.0
    %123 = vmatpush.msra.mxu0 0.0
    %124 = vmatpush.msra.mxu0 %v105
    %125 = vmatpush.msra.mxu0 %v104
    %126 = vmatpush.msra.mxu0 %v103
    %127 = vmatpush.msra.mxu0 %v102
    %128 = vmatpush.msra.mxu0 %v101
    %129 = vmatpush.msra.mxu0 %v100
    %130 = vmatmul.f32.gmra.mxu0 %v112
    %v131 = vpop.f32.mrf.mxu0
    %v132 = vadd.f32 %v108, %v131
    %133 = vdwg.mxu0
    %v134 = vxor.u32 %v132, 2147483648
    %v135 = vmul.f32 %v134, 1.442695
    %v136 = vpow.pop %v135
    %v137 = vadd.f32 %v136, 1.0
    %v138 = vrcp.pop %v137
    %v139 = vmul.f32 %v137, %v138
    %v140 = vsub.f32 1.0, %v139
    %v141 = vmul.f32 %v138, %v140
    %v142 = vadd.f32 %v138, %v141
    %vm143 = vweird.f32 %v137
    %vm144 = vweird.f32 %v138
    %vm145 = vmor %vm143, %vm144
    %v146 = vsel %vm145, %v138, %v142
    %v147 = vand.u32 2147483647, %v137
    %vm148 = vcmp.eq.f32.partialorder %v147, 8.507059e+37
    %v149 = vand.u32 %v137, 2147483648
    %v150 = vor.u32 1.1754944e-38, %v149
    %v151 = vsel %vm148, %v150, %v146
    %v152 = vmul.f32 1.0, %v151
    %vm153 = vcmask 523264
    %154 = vst.msk [vmem:[#allocation8] sm:$0xff] %vm153, %v152
    // Predicated region
    $region34: #{tpu_custom_call.1} parent=1 // pred_check
      _
    $region35: #{tpu_custom_call.1} parent=1 // pred_check_branch
      %156 = sbr.rel (0) target = $region37
    $region36: #{tpu_custom_call.1} parent=1 // pred_region
      %158 = vsyncadd [#allocation4], 0
      %s160 = sshll.u32 [#allocation8], 4
      %s161 = int_to_ptr.vmem [resolvable:$true] %s160
      %s162 = sshll.u32 %s5, 4
      %s163 = int_to_ptr.hbm [resolvable:$true] %s162
      %165 = dma.vmem_to_hbm [thread:$0]  %s161, 128, %s163, [#allocation4]
    $region37: #{tpu_custom_call.1} parent=1 // pred_fallthru
      _
    // Predicated region
    $region38: #{tpu_custom_call.1} parent=1 // pred_check
      _
    $region39: #{tpu_custom_call.1} parent=1 // pred_check_branch
      %167 = sbr.rel (0) target = $region41
    $region40: #{tpu_custom_call.1} parent=1 // pred_region
      %169 = dma.done [#allocation4], 128
    $region41: #{tpu_custom_call.1} parent=1 // pred_fallthru
      _
    %170 = vsyncpa [#allocation3], 1
    %171 = vsyncpa [#allocation6], 1
    %172 = vsyncpa [#allocation4], 1

</llo_original>
